<compile_context>
chip_gen: v7x
topology: tpu7x:2x2x1
jax: 0.10.0
libtpu: 0.0.40
codegen_flags: <defaults>
</compile_context>

<pallas_src>
import jax
import jax.numpy as jnp
from jax import lax
from jax.experimental import pallas as pl
from jax.experimental.pallas import tpu as pltpu

LANE = 128


def _round_up(x, m):
    return (x + m - 1) // m * m


def mlp_kernel(idx_ref, ew1_ref, b1_ref, w2_ref, b2_ref, w3_ref, b3_ref,
               out_ref):
    tile_b, n_tok = idx_ref.shape
    kdim, h1p = ew1_ref.shape
    vocab = kdim // n_tok
    cdt = ew1_ref.dtype                        # compute dtype (bf16)

    # Build one lane-contiguous (tile_b, n_tok*vocab) one-hot: segment i
    # occupies lanes [i*vocab, (i+1)*vocab) and selects row i*vocab + idx[:, i]
    # of the folded weight ew1 (exact 0/1 selection -> bit-exact gather).
    v_iota = lax.broadcasted_iota(jnp.int32, (tile_b, vocab), 1)
    segs = [(idx_ref[:, i:i + 1] == v_iota).astype(jnp.float32)
            for i in range(n_tok)]
    one_hot = jnp.concatenate(segs, axis=1).astype(cdt)   # (tile_b, n_tok*vocab)

    # Layer 1: single K=n_tok*vocab MXU matmul (embedding gather + Linear fused).
    h1 = jnp.dot(one_hot, ew1_ref[...], preferred_element_type=jnp.float32)
    h1 = jnp.maximum(h1 + b1_ref[...], 0.0).astype(cdt)

    # Layer 2: Linear + ReLU.
    h2 = jnp.dot(h1, w2_ref[...], preferred_element_type=jnp.float32)
    h2 = jnp.maximum(h2 + b2_ref[...], 0.0).astype(cdt)

    # Layer 3: Linear (output kept at its real width -> unpadded f32 store).
    out = jnp.dot(h2, w3_ref[...], preferred_element_type=jnp.float32)
    out_ref[...] = (out + b3_ref[...]).astype(out_ref.dtype)


def mlp_pallas(x, embedding, w1, b1, w2, b2, w3, b3, *,
               tile_b_max=1024, compute_dtype=jnp.bfloat16):
    """features = embedding[x].reshape(B, -1); Linear->ReLU->Linear->ReLU->Linear."""
    batch, n_tok = x.shape
    vocab, emb_dim = embedding.shape
    h1_dim, h2_dim, out_dim = w1.shape[1], w2.shape[1], w3.shape[1]

    # Pad hidden (contraction) dims to the 128-lane width.  Zero padding is
    # exact: padded activations stay 0 through bias=0 + ReLU; padded weight
    # rows are 0.  The output dim stays unpadded (contiguous HBM store).
    h1p = _round_up(h1_dim, LANE)
    h2p = _round_up(h2_dim, LANE)

    def pad2(a, rows, cols):
        return jnp.pad(a, ((0, rows - a.shape[0]), (0, cols - a.shape[1])))

    # Fold the embedding into W1 (computed in f32, one cast to bf16):
    # ew1[i*vocab + v, :] = sum_d emb[v, d] * w1[i*emb_dim + d, :]
    w1_3d = w1.reshape(n_tok, emb_dim, h1_dim)
    ew1 = jnp.einsum('vd,idh->ivh', embedding, w1_3d,
                     preferred_element_type=jnp.float32)
    ew1 = ew1.reshape(n_tok * vocab, h1_dim)
    ew1 = pad2(ew1, n_tok * vocab, h1p).astype(compute_dtype)
    b1p = pad2(b1.reshape(1, -1), 1, h1p).astype(jnp.float32)
    w2p = pad2(w2, h1p, h2p).astype(compute_dtype)
    b2p = pad2(b2.reshape(1, -1), 1, h2p).astype(jnp.float32)
    w3p = pad2(w3, h2p, out_dim).astype(compute_dtype)     # N kept unpadded
    b3p = b3.reshape(1, -1).astype(jnp.float32)

    # Batch tiling: big tiles amortize the ~0.35us/step pipeline overhead, but
    # keep >= 2 grid steps so ("parallel",) can shard over v7x's 2 TensorCores.
    tile_b = max(8, min(tile_b_max, _round_up(pl.cdiv(batch, 2), 8)))
    bp = _round_up(batch, tile_b)
    xp = jnp.pad(x, ((0, bp - batch), (0, 0)))      # index 0 is a valid pad row
    grid = (bp // tile_b,)

    def resident(a):
        # Same block every grid step -> stays in VMEM across the whole grid.
        return pl.BlockSpec(a.shape, lambda b, nd=a.ndim: (0,) * nd)

    flops = 2 * bp * (n_tok * vocab * h1p + h1p * h2p + h2p * out_dim)
    bytes_accessed = (xp.size * 4 + bp * out_dim * 4
                      + 2 * (ew1.size + w2p.size + w3p.size)
                      + 4 * (b1p.size + b2p.size + b3p.size))

    out = pl.pallas_call(
        mlp_kernel,
        out_shape=jax.ShapeDtypeStruct((bp, out_dim), jnp.float32),
        grid=grid,
        in_specs=[
            pl.BlockSpec((tile_b, n_tok), lambda b: (b, 0)),   # token indices
            resident(ew1), resident(b1p),
            resident(w2p), resident(b2p),
            resident(w3p), resident(b3p),
        ],
        out_specs=pl.BlockSpec((tile_b, out_dim), lambda b: (b, 0)),
        compiler_params=pltpu.CompilerParams(
            dimension_semantics=("parallel",)),    # shard batch over v7x's 2 TCs
        cost_estimate=pl.CostEstimate(
            flops=flops, transcendentals=0, bytes_accessed=bytes_accessed),
    )(xp, ew1, b1p, w2p, b2p, w3p, b3p)

    return out[:batch]


def multilayer_perceptron(x, embedding, params):
    return mlp_pallas(x, embedding, *params)


if __name__ == "__main__":
    batch = 4
    vocab = 32
    embedding_dim = 8
    input_dim = 8            # token indices per example
    hidden_dim1 = 32
    hidden_dim2 = 32         # != 0 -> 3-layer branch of the PyTorch module
    output_dim = 16
    feat_dim = input_dim * embedding_dim

    key = jax.random.PRNGKey(0)
    k_emb, k_x, kw1, kb1, kw2, kb2, kw3, kb3 = jax.random.split(key, 8)

    embedding = jax.random.normal(k_emb, (vocab, embedding_dim), dtype=jnp.float32)
    x = jax.random.randint(k_x, (batch, input_dim), 0, vocab, dtype=jnp.int32)

    def init_linear(kw, kb, fan_in, fan_out):
        bound = 1.0 / (fan_in ** 0.5)
        w = jax.random.uniform(kw, (fan_in, fan_out), jnp.float32, -bound, bound)
        b = jax.random.uniform(kb, (1, fan_out), jnp.float32, -bound, bound)
        return w, b

    w1, b1 = init_linear(kw1, kb1, feat_dim, hidden_dim1)
    w2, b2 = init_linear(kw2, kb2, hidden_dim1, hidden_dim2)
    w3, b3 = init_linear(kw3, kb3, hidden_dim2, output_dim)
    params = (w1, b1, w2, b2, w3, b3)

    out = multilayer_perceptron(x, embedding, params)
    jax.block_until_ready(out)

    # Reference: gather + bf16 matmuls with f32 accumulation (same compute
    # dtype as the kernel; the kernel additionally folds emb into w1, which
    # only adds ~bf16-epsilon-level rounding differences).
    bf = jnp.bfloat16
    feats = jnp.take(embedding.astype(bf), x, axis=0).reshape(batch, -1)
    ref = jnp.maximum(jnp.dot(feats, w1.astype(bf),
                              preferred_element_type=jnp.float32) + b1, 0.0)
    ref = jnp.maximum(jnp.dot(ref.astype(bf), w2.astype(bf),
                              preferred_element_type=jnp.float32) + b2, 0.0)
    ref = jnp.dot(ref.astype(bf), w3.astype(bf),
                  preferred_element_type=jnp.float32) + b3

    assert out.shape == (batch, output_dim)
    assert out.dtype == jnp.float32
    assert jnp.allclose(out, ref, atol=2e-2, rtol=2e-2), \
        float(jnp.max(jnp.abs(out - ref)))
    print("KERNEL_OK")
</pallas_src>

<mosaic_0001>
module attributes {stable_mosaic.version = 11 : i64} {
  func.func @mlp_kernel(%arg0: i32, %arg1: memref<8x8xi32, #tpu.memory_space<vmem>>, %arg2: memref<256x128xbf16, #tpu.memory_space<vmem>>, %arg3: memref<1x128xf32, #tpu.memory_space<vmem>>, %arg4: memref<128x128xbf16, #tpu.memory_space<vmem>>, %arg5: memref<1x128xf32, #tpu.memory_space<vmem>>, %arg6: memref<128x16xbf16, #tpu.memory_space<vmem>>, %arg7: memref<1x16xf32, #tpu.memory_space<vmem>>, %arg8: memref<8x16xf32, #tpu.memory_space<vmem>>) attributes {dimension_semantics = [#tpu.dimension_semantics<parallel>], iteration_bounds = array<i64: 1>, scalar_prefetch = 0 : i64, scratch_operands = 0 : i64, tpu.core_type = #tpu.core_type<tc>, window_params = [{transform_indices = @transform_0, window_bounds = array<i64: 8, 8>}, {pipeline_mode = #tpu.pipeline_mode<synchronous>, transform_indices = @transform_1, window_bounds = array<i64: 256, 128>}, {pipeline_mode = #tpu.pipeline_mode<synchronous>, transform_indices = @transform_2, window_bounds = array<i64: 1, 128>}, {pipeline_mode = #tpu.pipeline_mode<synchronous>, transform_indices = @transform_3, window_bounds = array<i64: 128, 128>}, {pipeline_mode = #tpu.pipeline_mode<synchronous>, transform_indices = @transform_4, window_bounds = array<i64: 1, 128>}, {pipeline_mode = #tpu.pipeline_mode<synchronous>, transform_indices = @transform_5, window_bounds = array<i64: 128, 16>}, {pipeline_mode = #tpu.pipeline_mode<synchronous>, transform_indices = @transform_6, window_bounds = array<i64: 1, 16>}, {transform_indices = @transform_7, window_bounds = array<i64: 8, 16>}]} {
    %0 = tpu.iota {dimensions = array<i32: 1>} : vector<8x32xi32>
    %c0 = arith.constant 0 : index
    %c0_0 = arith.constant 0 : index
    %1 = vector.load %arg1[%c0, %c0_0] : memref<8x8xi32, #tpu.memory_space<vmem>>, vector<8x1xi32>
    %2 = vector.broadcast %1 : vector<8x1xi32> to vector<8x32xi32>
    %3 = arith.cmpi eq, %2, %0 : vector<8x32xi32>
    %4 = arith.extui %3 : vector<8x32xi1> to vector<8x32xi32>
    %5 = arith.sitofp %4 : vector<8x32xi32> to vector<8x32xf32>
    %c0_1 = arith.constant 0 : index
    %c1 = arith.constant 1 : index
    %6 = vector.load %arg1[%c0_1, %c1] : memref<8x8xi32, #tpu.memory_space<vmem>>, vector<8x1xi32>
    %7 = vector.broadcast %6 : vector<8x1xi32> to vector<8x32xi32>
    %8 = arith.cmpi eq, %7, %0 : vector<8x32xi32>
    %9 = arith.extui %8 : vector<8x32xi1> to vector<8x32xi32>
    %10 = arith.sitofp %9 : vector<8x32xi32> to vector<8x32xf32>
    %c0_2 = arith.constant 0 : index
    %c2 = arith.constant 2 : index
    %11 = vector.load %arg1[%c0_2, %c2] : memref<8x8xi32, #tpu.memory_space<vmem>>, vector<8x1xi32>
    %12 = vector.broadcast %11 : vector<8x1xi32> to vector<8x32xi32>
    %13 = arith.cmpi eq, %12, %0 : vector<8x32xi32>
    %14 = arith.extui %13 : vector<8x32xi1> to vector<8x32xi32>
    %15 = arith.sitofp %14 : vector<8x32xi32> to vector<8x32xf32>
    %c0_3 = arith.constant 0 : index
    %c3 = arith.constant 3 : index
    %16 = vector.load %arg1[%c0_3, %c3] : memref<8x8xi32, #tpu.memory_space<vmem>>, vector<8x1xi32>
    %17 = vector.broadcast %16 : vector<8x1xi32> to vector<8x32xi32>
    %18 = arith.cmpi eq, %17, %0 : vector<8x32xi32>
    %19 = arith.extui %18 : vector<8x32xi1> to vector<8x32xi32>
    %20 = arith.sitofp %19 : vector<8x32xi32> to vector<8x32xf32>
    %c0_4 = arith.constant 0 : index
    %c4 = arith.constant 4 : index
    %21 = vector.load %arg1[%c0_4, %c4] : memref<8x8xi32, #tpu.memory_space<vmem>>, vector<8x1xi32>
    %22 = vector.broadcast %21 : vector<8x1xi32> to vector<8x32xi32>
    %23 = arith.cmpi eq, %22, %0 : vector<8x32xi32>
    %24 = arith.extui %23 : vector<8x32xi1> to vector<8x32xi32>
    %25 = arith.sitofp %24 : vector<8x32xi32> to vector<8x32xf32>
    %c0_5 = arith.constant 0 : index
    %c5 = arith.constant 5 : index
    %26 = vector.load %arg1[%c0_5, %c5] : memref<8x8xi32, #tpu.memory_space<vmem>>, vector<8x1xi32>
    %27 = vector.broadcast %26 : vector<8x1xi32> to vector<8x32xi32>
    %28 = arith.cmpi eq, %27, %0 : vector<8x32xi32>
    %29 = arith.extui %28 : vector<8x32xi1> to vector<8x32xi32>
    %30 = arith.sitofp %29 : vector<8x32xi32> to vector<8x32xf32>
    %c0_6 = arith.constant 0 : index
    %c6 = arith.constant 6 : index
    %31 = vector.load %arg1[%c0_6, %c6] : memref<8x8xi32, #tpu.memory_space<vmem>>, vector<8x1xi32>
    %32 = vector.broadcast %31 : vector<8x1xi32> to vector<8x32xi32>
    %33 = arith.cmpi eq, %32, %0 : vector<8x32xi32>
    %34 = arith.extui %33 : vector<8x32xi1> to vector<8x32xi32>
    %35 = arith.sitofp %34 : vector<8x32xi32> to vector<8x32xf32>
    %c0_7 = arith.constant 0 : index
    %c7 = arith.constant 7 : index
    %36 = vector.load %arg1[%c0_7, %c7] : memref<8x8xi32, #tpu.memory_space<vmem>>, vector<8x1xi32>
    %37 = vector.broadcast %36 : vector<8x1xi32> to vector<8x32xi32>
    %38 = arith.cmpi eq, %37, %0 : vector<8x32xi32>
    %39 = arith.extui %38 : vector<8x32xi1> to vector<8x32xi32>
    %40 = arith.sitofp %39 : vector<8x32xi32> to vector<8x32xf32>
    %41 = tpu.concatenate %5, %10, %15, %20, %25, %30, %35, %40 in 1 : vector<8x32xf32>, vector<8x32xf32>, vector<8x32xf32>, vector<8x32xf32>, vector<8x32xf32>, vector<8x32xf32>, vector<8x32xf32>, vector<8x32xf32> -> vector<8x256xf32>
    %42 = arith.truncf %41 : vector<8x256xf32> to vector<8x256xbf16>
    %c0_8 = arith.constant 0 : index
    %c0_9 = arith.constant 0 : index
    %43 = vector.load %arg2[%c0_8, %c0_9] : memref<256x128xbf16, #tpu.memory_space<vmem>>, vector<256x128xbf16>
    %cst = arith.constant dense<0.000000e+00> : vector<8x128xf32>
    %44 = tpu.matmul %42, %43, %cst {dimension_numbers = #tpu.dot_dimension_numbers<[1], [0], [0], [1], [0, 0, 1, 1], [], []>} : vector<8x256xbf16>, vector<256x128xbf16>, vector<8x128xf32> -> vector<8x128xf32>
    %c0_10 = arith.constant 0 : index
    %c0_11 = arith.constant 0 : index
    %45 = vector.load %arg3[%c0_10, %c0_11] : memref<1x128xf32, #tpu.memory_space<vmem>>, vector<1x128xf32>
    %46 = vector.broadcast %45 : vector<1x128xf32> to vector<8x128xf32>
    %47 = arith.addf %44, %46 : vector<8x128xf32>
    %cst_12 = arith.constant 0.000000e+00 : f32
    %48 = vector.broadcast %cst_12 : f32 to vector<8x128xf32>
    %49 = arith.maximumf %47, %48 : vector<8x128xf32>
    %50 = arith.truncf %49 : vector<8x128xf32> to vector<8x128xbf16>
    %c0_13 = arith.constant 0 : index
    %c0_14 = arith.constant 0 : index
    %51 = vector.load %arg4[%c0_13, %c0_14] : memref<128x128xbf16, #tpu.memory_space<vmem>>, vector<128x128xbf16>
    %cst_15 = arith.constant dense<0.000000e+00> : vector<8x128xf32>
    %52 = tpu.matmul %50, %51, %cst_15 {dimension_numbers = #tpu.dot_dimension_numbers<[1], [0], [0], [1], [0, 0, 1, 1], [], []>} : vector<8x128xbf16>, vector<128x128xbf16>, vector<8x128xf32> -> vector<8x128xf32>
    %c0_16 = arith.constant 0 : index
    %c0_17 = arith.constant 0 : index
    %53 = vector.load %arg5[%c0_16, %c0_17] : memref<1x128xf32, #tpu.memory_space<vmem>>, vector<1x128xf32>
    %54 = vector.broadcast %53 : vector<1x128xf32> to vector<8x128xf32>
    %55 = arith.addf %52, %54 : vector<8x128xf32>
    %cst_18 = arith.constant 0.000000e+00 : f32
    %56 = vector.broadcast %cst_18 : f32 to vector<8x128xf32>
    %57 = arith.maximumf %55, %56 : vector<8x128xf32>
    %58 = arith.truncf %57 : vector<8x128xf32> to vector<8x128xbf16>
    %c0_19 = arith.constant 0 : index
    %c0_20 = arith.constant 0 : index
    %59 = vector.load %arg6[%c0_19, %c0_20] : memref<128x16xbf16, #tpu.memory_space<vmem>>, vector<128x16xbf16>
    %cst_21 = arith.constant dense<0.000000e+00> : vector<8x16xf32>
    %60 = tpu.matmul %58, %59, %cst_21 {dimension_numbers = #tpu.dot_dimension_numbers<[1], [0], [0], [1], [0, 0, 1, 1], [], []>} : vector<8x128xbf16>, vector<128x16xbf16>, vector<8x16xf32> -> vector<8x16xf32>
    %c0_22 = arith.constant 0 : index
    %c0_23 = arith.constant 0 : index
    %61 = vector.load %arg7[%c0_22, %c0_23] : memref<1x16xf32, #tpu.memory_space<vmem>>, vector<1x16xf32>
    %62 = vector.broadcast %61 : vector<1x16xf32> to vector<8x16xf32>
    %63 = arith.addf %60, %62 : vector<8x16xf32>
    %c0_24 = arith.constant 0 : index
    %c0_25 = arith.constant 0 : index
    %64 = vector.load %arg8[%c0_24, %c0_25] : memref<8x16xf32, #tpu.memory_space<vmem>>, vector<8x16xf32>
    tpu.vector_store %arg8[%c0_24, %c0_25], %63 {strides = array<i32>} : memref<8x16xf32, #tpu.memory_space<vmem>>, vector<8x16xf32>,
    return
  }
  func.func @transform_0(%arg0: i32) -> (i32, i32) {
    %c0_i32 = arith.constant 0 : i32
    %c0_i32_0 = arith.constant 0 : i32
    return %arg0, %c0_i32 : i32, i32
  }
  func.func @transform_1(%arg0: i32) -> (i32, i32) {
    %c0_i32 = arith.constant 0 : i32
    %c0_i32_0 = arith.constant 0 : i32
    %c0_i32_1 = arith.constant 0 : i32
    return %c0_i32, %c0_i32_0 : i32, i32
  }
  func.func @transform_2(%arg0: i32) -> (i32, i32) {
    %c0_i32 = arith.constant 0 : i32
    %c0_i32_0 = arith.constant 0 : i32
    %c0_i32_1 = arith.constant 0 : i32
    return %c0_i32, %c0_i32_0 : i32, i32
  }
  func.func @transform_3(%arg0: i32) -> (i32, i32) {
    %c0_i32 = arith.constant 0 : i32
    %c0_i32_0 = arith.constant 0 : i32
    %c0_i32_1 = arith.constant 0 : i32
    return %c0_i32, %c0_i32_0 : i32, i32
  }
  func.func @transform_4(%arg0: i32) -> (i32, i32) {
    %c0_i32 = arith.constant 0 : i32
    %c0_i32_0 = arith.constant 0 : i32
    %c0_i32_1 = arith.constant 0 : i32
    return %c0_i32, %c0_i32_0 : i32, i32
  }
  func.func @transform_5(%arg0: i32) -> (i32, i32) {
    %c0_i32 = arith.constant 0 : i32
    %c0_i32_0 = arith.constant 0 : i32
    %c0_i32_1 = arith.constant 0 : i32
    return %c0_i32, %c0_i32_0 : i32, i32
  }
  func.func @transform_6(%arg0: i32) -> (i32, i32) {
    %c0_i32 = arith.constant 0 : i32
    %c0_i32_0 = arith.constant 0 : i32
    %c0_i32_1 = arith.constant 0 : i32
    return %c0_i32, %c0_i32_0 : i32, i32
  }
  func.func @transform_7(%arg0: i32) -> (i32, i32) {
    %c0_i32 = arith.constant 0 : i32
    %c0_i32_0 = arith.constant 0 : i32
    return %arg0, %c0_i32 : i32, i32
  }
}

</mosaic_0001>

<llo_original>
// kernel: tpu_custom_call.1
$region0: #{tpu_custom_call.1}
  #allocation0 [shape = 'u32[]', space=smem, size = 0x4, offset = 0x4, fixed_abs, tag = 'smem constant byte address 0x4 - core index']
  #allocation1 [shape = 'u32[144,128]{1,0:T(1,128)}', space=vmem, size = 0x12000, scoped, tag = 'internal scratch']
  %s0 = inlined_call_operand.vmem [shape: s32[8,8], index: 0, kind: input, shape index: {}]
  %s1 = inlined_call_operand.hbm [shape: bf16[256,128], index: 1, kind: input, shape index: {}]
  %s2 = inlined_call_operand.vmem [shape: f32[1,128], index: 2, kind: input, shape index: {}]
  %s3 = inlined_call_operand.vmem [shape: bf16[128,128], index: 3, kind: input, shape index: {}]
  %s4 = inlined_call_operand.vmem [shape: f32[1,128], index: 4, kind: input, shape index: {}]
  %s5 = inlined_call_operand.vmem [shape: bf16[128,16], index: 5, kind: input, shape index: {}]
  %s6 = inlined_call_operand.vmem [shape: f32[1,16], index: 6, kind: input, shape index: {}]
  %s7 = inlined_call_operand.hbm [shape: f32[8,16], index: 7, kind: output, shape index: {}]
  %s8 = sld [smem:[#allocation0]]
  $region42: #{tpu_custom_call.1} parent=0
    _
  %s10 = ssub.s32 1, %s8
  %s11 = scalar_select 0, %s10, %s8
  $region1: #{tpu_custom_call.1} parent=0
    #allocation2 [shape = 'u8[65536]{0}', space=vmem, size = 0x10000, scoped, tag = 'input window, operand 1, single buffered']
    #allocation3 [shape = 's32[1]{0}', space=sflag, size = 0x4, scoped, tag = 'scoped memory for tpu_custom_call.1']
    #allocation4 [shape = 's32[1]{0}', space=sflag, size = 0x4, scoped, tag = 'scoped memory for tpu_custom_call.1']
    #allocation5 [shape = 'u8[4096]{0}', space=vmem, size = 0x1000, scoped, tag = 'output window, operand 0, single buffered']
    %12 = vsyncpa [#allocation3], 0
    %13 = vsyncpa [#allocation4], 0
    // Predicated region
    $region2: #{tpu_custom_call.1} parent=1 // pred_check
      _
    $region3: #{tpu_custom_call.1} parent=1 // pred_check_branch
      %15 = sbr.rel (0) target = $region5
    $region4: #{tpu_custom_call.1} parent=1 // pred_region
      _
    $region5: #{tpu_custom_call.1} parent=1 // pred_fallthru
      _
    // Predicated region
    $region6: #{tpu_custom_call.1} parent=1 // pred_check
      _
    $region7: #{tpu_custom_call.1} parent=1 // pred_check_branch
      %17 = sbr.rel (0) target = $region9
    $region8: #{tpu_custom_call.1} parent=1 // pred_region
      %s19 = ssub.s32 2048, 2048
      %20 = vsyncadd [#allocation3], %s19
      %s21 = sshll.u32 [#allocation2], 4
      %s22 = int_to_ptr.vmem [resolvable:$true] %s21
      %27 = dma.hbm_to_vmem [thread:$0]  %s1, 2048, %s22, [#allocation3], 64, 64, 4
    $region9: #{tpu_custom_call.1} parent=1 // pred_fallthru
      _
    // Predicated region
    $region10: #{tpu_custom_call.1} parent=1 // pred_check
      _
    $region11: #{tpu_custom_call.1} parent=1 // pred_check_branch
      %29 = sbr.rel (0) target = $region13
    $region12: #{tpu_custom_call.1} parent=1 // pred_region
      _
    $region13: #{tpu_custom_call.1} parent=1 // pred_fallthru
      _
    // Predicated region
    $region14: #{tpu_custom_call.1} parent=1 // pred_check
      _
    $region15: #{tpu_custom_call.1} parent=1 // pred_check_branch
      %31 = sbr.rel (0) target = $region17
    $region16: #{tpu_custom_call.1} parent=1 // pred_region
      _
    $region17: #{tpu_custom_call.1} parent=1 // pred_fallthru
      _
    // Predicated region
    $region18: #{tpu_custom_call.1} parent=1 // pred_check
      _
    $region19: #{tpu_custom_call.1} parent=1 // pred_check_branch
      %33 = sbr.rel (0) target = $region21
    $region20: #{tpu_custom_call.1} parent=1 // pred_region
      _
    $region21: #{tpu_custom_call.1} parent=1 // pred_fallthru
      _
    // Predicated region
    $region22: #{tpu_custom_call.1} parent=1 // pred_check
      _
    $region23: #{tpu_custom_call.1} parent=1 // pred_check_branch
      %35 = sbr.rel (0) target = $region25
    $region24: #{tpu_custom_call.1} parent=1 // pred_region
      _
    $region25: #{tpu_custom_call.1} parent=1 // pred_fallthru
      _
    // Predicated region
    $region26: #{tpu_custom_call.1} parent=1 // pred_check
      _
    $region27: #{tpu_custom_call.1} parent=1 // pred_check_branch
      %37 = sbr.rel (0) target = $region29
    $region28: #{tpu_custom_call.1} parent=1 // pred_region
      _
    $region29: #{tpu_custom_call.1} parent=1 // pred_fallthru
      _
    // Predicated region
    $region30: #{tpu_custom_call.1} parent=1 // pred_check
      _
    $region31: #{tpu_custom_call.1} parent=1 // pred_check_branch
      %39 = sbr.rel (0) target = $region33
    $region32: #{tpu_custom_call.1} parent=1 // pred_region
      %40 = dma.done [#allocation3], 2048
    $region33: #{tpu_custom_call.1} parent=1 // pred_fallthru
      _
    %v42 = vlaneseq
    %v43 = vand.u32 %v42, 127
    %v44 = vld [vmem:[%s0] sm:$0xff]
    %45 = vset.pattern.permute.xlu0 0
    %46 = vperm.xlu0 %45, %v44
    %v47 = vpop.permute.xlu0 %46
    %vm48 = vcmp.eq.s32.totalorder %v47, %v43
    %v49 = vsel %vm48, 1, 0
    %v50 = vcvt.s32.f32 %v49
    %51 = vset.pattern.permute.xlu0 1
    %52 = vperm.xlu0 %51, %v44
    %v53 = vpop.permute.xlu0 %52
    %vm54 = vcmp.eq.s32.totalorder %v53, %v43
    %v55 = vsel %vm54, 1, 0
    %v56 = vcvt.s32.f32 %v55
    %57 = vset.pattern.permute.xlu0 2
    %58 = vperm.xlu0 %57, %v44
    %v59 = vpop.permute.xlu0 %58
    %vm60 = vcmp.eq.s32.totalorder %v59, %v43
    %v61 = vsel %vm60, 1, 0
    %v62 = vcvt.s32.f32 %v61
    %63 = vset.pattern.permute.xlu0 3
    %64 = vperm.xlu0 %63, %v44
    %v65 = vpop.permute.xlu0 %64
    %vm66 = vcmp.eq.s32.totalorder %v65, %v43
    %v67 = vsel %vm66, 1, 0
    %v68 = vcvt.s32.f32 %v67
    %69 = vset.pattern.permute.xlu0 4
    %70 = vperm.xlu0 %69, %v44
    %v71 = vpop.permute.xlu0 %70
    %vm72 = vcmp.eq.s32.totalorder %v71, %v43
    %v73 = vsel %vm72, 1, 0
    %v74 = vcvt.s32.f32 %v73
    %75 = vset.pattern.permute.xlu0 5
    %76 = vperm.xlu0 %75, %v44
    %v77 = vpop.permute.xlu0 %76
    %vm78 = vcmp.eq.s32.totalorder %v77, %v43
    %v79 = vsel %vm78, 1, 0
    %v80 = vcvt.s32.f32 %v79
    %81 = vset.pattern.permute.xlu0 6
    %82 = vperm.xlu0 %81, %v44
    %v83 = vpop.permute.xlu0 %82
    %vm84 = vcmp.eq.s32.totalorder %v83, %v43
    %v85 = vsel %vm84, 1, 0
    %v86 = vcvt.s32.f32 %v85
    %87 = vset.pattern.permute.xlu0 7
    %88 = vperm.xlu0 %87, %v44
    %v89 = vpop.permute.xlu0 %88
    %vm90 = vcmp.eq.s32.totalorder %v89, %v43
    %v91 = vsel %vm90, 1, 0
    %v92 = vcvt.s32.f32 %v91
    %94 = vrot.lane.b32.xlu0 %v56, 32
    %v95 = vpop.permute.xlu0 %94
    %98 = vrot.lane.b32.xlu0 %v62, 64
    %v99 = vpop.permute.xlu0 %98
    %102 = vrot.lane.b32.xlu0 %v68, 96
    %v103 = vpop.permute.xlu0 %102
    %106 = vrot.lane.b32.xlu0 %v80, 32
    %v107 = vpop.permute.xlu0 %106
    %110 = vrot.lane.b32.xlu0 %v86, 64
    %v111 = vpop.permute.xlu0 %110
    %114 = vrot.lane.b32.xlu0 %v92, 96
    %v115 = vpop.permute.xlu0 %114
    %vm117 = vcmask 261120
    %v118 = vsel %vm117, %v50, %v95
    %vm119 = vcmask 523264
    %v120 = vsel %vm119, %v118, %v99
    %vm121 = vcmask 785408
    %v122 = vsel %vm121, %v120, %v103
    %v123 = vsel %vm117, %v74, %v107
    %v124 = vsel %vm119, %v123, %v111
    %v125 = vsel %vm121, %v124, %v115
    %v126 = vpack.c.bf16 %v122, %v122
    %v127 = vpack.c.bf16 %v125, %v125
    %v128 = vld [vmem:[#allocation2] sm:$0xf]
    %v129 = vld [vmem:[#allocation2 + $0x4] sm:$0xf]
    %v130 = vld [vmem:[#allocation2 + $0x8] sm:$0xf]
    %v131 = vld [vmem:[#allocation2 + $0xc] sm:$0xf]
    %v132 = vld [vmem:[#allocation2 + $0x10] sm:$0xf]
    %v133 = vld [vmem:[#allocation2 + $0x14] sm:$0xf]
    %v134 = vld [vmem:[#allocation2 + $0x18] sm:$0xf]
    %v135 = vld [vmem:[#allocation2 + $0x1c] sm:$0xf]
    %v136 = vld [vmem:[#allocation2 + $0x20] sm:$0xf]
    %v137 = vld [vmem:[#allocation2 + $0x24] sm:$0xf]
    %v138 = vld [vmem:[#allocation2 + $0x28] sm:$0xf]
    %v139 = vld [vmem:[#allocation2 + $0x2c] sm:$0xf]
    %v140 = vld [vmem:[#allocation2 + $0x30] sm:$0xf]
    %v141 = vld [vmem:[#allocation2 + $0x34] sm:$0xf]
    %v142 = vld [vmem:[#allocation2 + $0x38] sm:$0xf]
    %v143 = vld [vmem:[#allocation2 + $0x3c] sm:$0xf]
    %v144 = vld [vmem:[#allocation2 + $0x40] sm:$0xf]
    %v145 = vld [vmem:[#allocation2 + $0x44] sm:$0xf]
    %v146 = vld [vmem:[#allocation2 + $0x48] sm:$0xf]
    %v147 = vld [vmem:[#allocation2 + $0x4c] sm:$0xf]
    %v148 = vld [vmem:[#allocation2 + $0x50] sm:$0xf]
    %v149 = vld [vmem:[#allocation2 + $0x54] sm:$0xf]
    %v150 = vld [vmem:[#allocation2 + $0x58] sm:$0xf]
    %v151 = vld [vmem:[#allocation2 + $0x5c] sm:$0xf]
    %v152 = vld [vmem:[#allocation2 + $0x60] sm:$0xf]
    %v153 = vld [vmem:[#allocation2 + $0x64] sm:$0xf]
    %v154 = vld [vmem:[#allocation2 + $0x68] sm:$0xf]
    %v155 = vld [vmem:[#allocation2 + $0x6c] sm:$0xf]
    %v156 = vld [vmem:[#allocation2 + $0x70] sm:$0xf]
    %v157 = vld [vmem:[#allocation2 + $0x74] sm:$0xf]
    %v158 = vld [vmem:[#allocation2 + $0x78] sm:$0xf]
    %v159 = vld [vmem:[#allocation2 + $0x7c] sm:$0xf]
    %v160 = vld [vmem:[%s2] sm:$0x1]
    %v162 = vlaneseq
    %v163 = vshrl.u32 %v162, 7
    %v164 = vsub.s32 0, %v163
    %v165 = vrot.slane %v160, %v164
    %v199 = vunpack.c.l.b16 %v128
    %v200 = vunpack.c.l.b16 %v129
    %v201 = vunpack.c.l.b16 %v130
    %v202 = vunpack.c.l.b16 %v131
    %v203 = vunpack.c.l.b16 %v132
    %v204 = vunpack.c.l.b16 %v133
    %v205 = vunpack.c.l.b16 %v134
    %v206 = vunpack.c.l.b16 %v135
    %v207 = vunpack.c.l.b16 %v136
    %v208 = vunpack.c.l.b16 %v137
    %v209 = vunpack.c.l.b16 %v138
    %v210 = vunpack.c.l.b16 %v139
    %v211 = vunpack.c.l.b16 %v140
    %v212 = vunpack.c.l.b16 %v141
    %v213 = vunpack.c.l.b16 %v142
    %v214 = vunpack.c.l.b16 %v143
    %v215 = vunpack.c.l.b16 %v144
    %v216 = vunpack.c.l.b16 %v145
    %v217 = vunpack.c.l.b16 %v146
    %v218 = vunpack.c.l.b16 %v147
    %v219 = vunpack.c.l.b16 %v148
    %v220 = vunpack.c.l.b16 %v149
    %v221 = vunpack.c.l.b16 %v150
    %v222 = vunpack.c.l.b16 %v151
    %v223 = vunpack.c.l.b16 %v152
    %v224 = vunpack.c.l.b16 %v153
    %v225 = vunpack.c.l.b16 %v154
    %v226 = vunpack.c.l.b16 %v155
    %v227 = vunpack.c.l.b16 %v156
    %v228 = vunpack.c.l.b16 %v157
    %v229 = vunpack.c.l.b16 %v158
    %v230 = vunpack.c.l.b16 %v159
    %v231 = vpack.c.b16 %v200, %v199
    %v232 = vpack.c.b16 %v202, %v201
    %v233 = vpack.c.b16 %v204, %v203
    %v234 = vpack.c.b16 %v206, %v205
    %v235 = vpack.c.b16 %v208, %v207
    %v236 = vpack.c.b16 %v210, %v209
    %v237 = vpack.c.b16 %v212, %v211
    %v238 = vpack.c.b16 %v214, %v213
    %v239 = vpack.c.b16 %v216, %v215
    %v240 = vpack.c.b16 %v218, %v217
    %v241 = vpack.c.b16 %v220, %v219
    %v242 = vpack.c.b16 %v222, %v221
    %v243 = vpack.c.b16 %v224, %v223
    %v244 = vpack.c.b16 %v226, %v225
    %v245 = vpack.c.b16 %v228, %v227
    %v246 = vpack.c.b16 %v230, %v229
    %263 = vmatprep.subr.bf16.mxu0 0
    %264 = vmatpush1.bf16.msra.mxu0 %v231
    %265 = vmatprep.subr.bf16.mxu0 0
    %266 = vmatpush1.bf16.msra.mxu0 %v232
    %267 = vmatprep.subr.bf16.mxu0 0
    %268 = vmatpush1.bf16.msra.mxu0 %v233
    %269 = vmatprep.subr.bf16.mxu0 0
    %270 = vmatpush1.bf16.msra.mxu0 %v234
    %271 = vmatprep.subr.bf16.mxu0 0
    %272 = vmatpush1.bf16.msra.mxu0 %v235
    %273 = vmatprep.subr.bf16.mxu0 0
    %274 = vmatpush1.bf16.msra.mxu0 %v236
    %275 = vmatprep.subr.bf16.mxu0 0
    %276 = vmatpush1.bf16.msra.mxu0 %v237
    %277 = vmatprep.subr.bf16.mxu0 0
    %278 = vmatpush1.bf16.msra.mxu0 %v238
    %279 = vmatprep.subr.bf16.mxu0 0
    %280 = vmatpush1.bf16.msra.mxu0 %v239
    %281 = vmatprep.subr.bf16.mxu0 0
    %282 = vmatpush1.bf16.msra.mxu0 %v240
    %283 = vmatprep.subr.bf16.mxu0 0
    %284 = vmatpush1.bf16.msra.mxu0 %v241
    %285 = vmatprep.subr.bf16.mxu0 0
    %286 = vmatpush1.bf16.msra.mxu0 %v242
    %287 = vmatprep.subr.bf16.mxu0 0
    %288 = vmatpush1.bf16.msra.mxu0 %v243
    %289 = vmatprep.subr.bf16.mxu0 0
    %290 = vmatpush1.bf16.msra.mxu0 %v244
    %291 = vmatprep.subr.bf16.mxu0 0
    %292 = vmatpush1.bf16.msra.mxu0 %v245
    %293 = vmatprep.subr.bf16.mxu0 0
    %294 = vmatpush1.bf16.msra.mxu0 %v246
    %295 = vmatprep.mubr.bf16.mxu0 %v127
    %296 = vmatmul.mubr.bf16.gmra.mrb[0].mxu0 %v126
    %v297 = vpop.f32.mrb[0].mxu0
    %v298 = vadd.f32 %v165, %v297
    %v299 = vpop.f32.mrb[0].mxu0
    %v300 = vpop.f32.mrb[0].mxu0
    %v301 = vpop.f32.mrb[0].mxu0
    %302 = vdwg.mxu0
    %v303 = vmax.f32 %v298, 0.0
    %v304 = vpack.c.bf16 %v303, %v303
    %v305 = vld [vmem:[%s3] sm:$0xf]
    %v306 = vld [vmem:[%s3 + $0x4] sm:$0xf]
    %v307 = vld [vmem:[%s3 + $0x8] sm:$0xf]
    %v308 = vld [vmem:[%s3 + $0xc] sm:$0xf]
    %v309 = vld [vmem:[%s3 + $0x10] sm:$0xf]
    %v310 = vld [vmem:[%s3 + $0x14] sm:$0xf]
    %v311 = vld [vmem:[%s3 + $0x18] sm:$0xf]
    %v312 = vld [vmem:[%s3 + $0x1c] sm:$0xf]
    %v313 = vld [vmem:[%s3 + $0x20] sm:$0xf]
    %v314 = vld [vmem:[%s3 + $0x24] sm:$0xf]
    %v315 = vld [vmem:[%s3 + $0x28] sm:$0xf]
    %v316 = vld [vmem:[%s3 + $0x2c] sm:$0xf]
    %v317 = vld [vmem:[%s3 + $0x30] sm:$0xf]
    %v318 = vld [vmem:[%s3 + $0x34] sm:$0xf]
    %v319 = vld [vmem:[%s3 + $0x38] sm:$0xf]
    %v320 = vld [vmem:[%s3 + $0x3c] sm:$0xf]
    %v321 = vld [vmem:[%s4] sm:$0x1]
    %v323 = vlaneseq
    %v324 = vshrl.u32 %v323, 7
    %v325 = vsub.s32 0, %v324
    %v326 = vrot.slane %v321, %v325
    %v344 = vunpack.c.l.b16 %v305
    %v345 = vunpack.c.l.b16 %v306
    %v346 = vunpack.c.l.b16 %v307
    %v347 = vunpack.c.l.b16 %v308
    %v348 = vunpack.c.l.b16 %v309
    %v349 = vunpack.c.l.b16 %v310
    %v350 = vunpack.c.l.b16 %v311
    %v351 = vunpack.c.l.b16 %v312
    %v352 = vunpack.c.l.b16 %v313
    %v353 = vunpack.c.l.b16 %v314
    %v354 = vunpack.c.l.b16 %v315
    %v355 = vunpack.c.l.b16 %v316
    %v356 = vunpack.c.l.b16 %v317
    %v357 = vunpack.c.l.b16 %v318
    %v358 = vunpack.c.l.b16 %v319
    %v359 = vunpack.c.l.b16 %v320
    %v360 = vpack.c.b16 %v345, %v344
    %v361 = vpack.c.b16 %v347, %v346
    %v362 = vpack.c.b16 %v349, %v348
    %v363 = vpack.c.b16 %v351, %v350
    %v364 = vpack.c.b16 %v353, %v352
    %v365 = vpack.c.b16 %v355, %v354
    %v366 = vpack.c.b16 %v357, %v356
    %v367 = vpack.c.b16 %v359, %v358
    %376 = vmatprep.subr.bf16.mxu0 0
    %377 = vmatpush1.bf16.msra.mxu0 %v360
    %378 = vmatprep.subr.bf16.mxu0 0
    %379 = vmatpush1.bf16.msra.mxu0 %v361
    %380 = vmatprep.subr.bf16.mxu0 0
    %381 = vmatpush1.bf16.msra.mxu0 %v362
    %382 = vmatprep.subr.bf16.mxu0 0
    %383 = vmatpush1.bf16.msra.mxu0 %v363
    %384 = vmatprep.subr.bf16.mxu0 0
    %385 = vmatpush1.bf16.msra.mxu0 %v364
    %386 = vmatprep.subr.bf16.mxu0 0
    %387 = vmatpush1.bf16.msra.mxu0 %v365
    %388 = vmatprep.subr.bf16.mxu0 0
    %389 = vmatpush1.bf16.msra.mxu0 %v366
    %390 = vmatprep.subr.bf16.mxu0 0
    %391 = vmatpush1.bf16.msra.mxu0 %v367
    %392 = vmatprep.subr.bf16.mxu0 0
    %393 = vmatpush1.bf16.msra.mxu0 0
    %394 = vmatprep.subr.bf16.mxu0 0
    %395 = vmatpush1.bf16.msra.mxu0 0
    %396 = vmatprep.subr.bf16.mxu0 0
    %397 = vmatpush1.bf16.msra.mxu0 0
    %398 = vmatprep.subr.bf16.mxu0 0
    %399 = vmatpush1.bf16.msra.mxu0 0
    %400 = vmatprep.subr.bf16.mxu0 0
    %401 = vmatpush1.bf16.msra.mxu0 0
    %402 = vmatprep.subr.bf16.mxu0 0
    %403 = vmatpush1.bf16.msra.mxu0 0
    %404 = vmatprep.subr.bf16.mxu0 0
    %405 = vmatpush1.bf16.msra.mxu0 0
    %406 = vmatprep.subr.bf16.mxu0 0
    %407 = vmatpush1.bf16.msra.mxu0 0
    %408 = vmatprep.mubr.bf16.mxu0 0
    %409 = vmatmul.mubr.bf16.gmra.mrb[0].mxu0 %v304
    %v410 = vpop.f32.mrb[0].mxu0
    %v411 = vadd.f32 %v326, %v410
    %v412 = vpop.f32.mrb[0].mxu0
    %v413 = vpop.f32.mrb[0].mxu0
    %v414 = vpop.f32.mrb[0].mxu0
    %415 = vdwg.mxu0
    %v416 = vmax.f32 %v411, 0.0
    %v417 = vpack.c.bf16 %v416, %v416
    %v418 = vld [vmem:[%s5] sm:$0xf]
    %v419 = vld [vmem:[%s5 + $0x4] sm:$0xf]
    %v420 = vld [vmem:[%s5 + $0x8] sm:$0xf]
    %v421 = vld [vmem:[%s5 + $0xc] sm:$0xf]
    %v422 = vld [vmem:[%s5 + $0x10] sm:$0xf]
    %v423 = vld [vmem:[%s5 + $0x14] sm:$0xf]
    %v424 = vld [vmem:[%s5 + $0x18] sm:$0xf]
    %v425 = vld [vmem:[%s5 + $0x1c] sm:$0xf]
    %v426 = vld [vmem:[%s5 + $0x20] sm:$0xf]
    %v427 = vld [vmem:[%s5 + $0x24] sm:$0xf]
    %v428 = vld [vmem:[%s5 + $0x28] sm:$0xf]
    %v429 = vld [vmem:[%s5 + $0x2c] sm:$0xf]
    %v430 = vld [vmem:[%s5 + $0x30] sm:$0xf]
    %v431 = vld [vmem:[%s5 + $0x34] sm:$0xf]
    %v432 = vld [vmem:[%s5 + $0x38] sm:$0xf]
    %v433 = vld [vmem:[%s5 + $0x3c] sm:$0xf]
    %v434 = vld [vmem:[%s6] sm:$0x1]
    %v436 = vlaneseq
    %v437 = vshrl.u32 %v436, 7
    %v438 = vsub.s32 0, %v437
    %v439 = vrot.slane %v434, %v438
    %v457 = vunpack.c.l.b16 %v418
    %v458 = vunpack.c.l.b16 %v419
    %v459 = vunpack.c.l.b16 %v420
    %v460 = vunpack.c.l.b16 %v421
    %v461 = vunpack.c.l.b16 %v422
    %v462 = vunpack.c.l.b16 %v423
    %v463 = vunpack.c.l.b16 %v424
    %v464 = vunpack.c.l.b16 %v425
    %v465 = vunpack.c.l.b16 %v426
    %v466 = vunpack.c.l.b16 %v427
    %v467 = vunpack.c.l.b16 %v428
    %v468 = vunpack.c.l.b16 %v429
    %v469 = vunpack.c.l.b16 %v430
    %v470 = vunpack.c.l.b16 %v431
    %v471 = vunpack.c.l.b16 %v432
    %v472 = vunpack.c.l.b16 %v433
    %v473 = vpack.c.b16 %v458, %v457
    %v474 = vpack.c.b16 %v460, %v459
    %v475 = vpack.c.b16 %v462, %v461
    %v476 = vpack.c.b16 %v464, %v463
    %v477 = vpack.c.b16 %v466, %v465
    %v478 = vpack.c.b16 %v468, %v467
    %v479 = vpack.c.b16 %v470, %v469
    %v480 = vpack.c.b16 %v472, %v471
    %489 = vmatprep.subr.bf16.mxu0 0
    %490 = vmatpush1.bf16.msra.mxu0 %v473
    %491 = vmatprep.subr.bf16.mxu0 0
    %492 = vmatpush1.bf16.msra.mxu0 %v474
    %493 = vmatprep.subr.bf16.mxu0 0
    %494 = vmatpush1.bf16.msra.mxu0 %v475
    %495 = vmatprep.subr.bf16.mxu0 0
    %496 = vmatpush1.bf16.msra.mxu0 %v476
    %497 = vmatprep.subr.bf16.mxu0 0
    %498 = vmatpush1.bf16.msra.mxu0 %v477
    %499 = vmatprep.subr.bf16.mxu0 0
    %500 = vmatpush1.bf16.msra.mxu0 %v478
    %501 = vmatprep.subr.bf16.mxu0 0
    %502 = vmatpush1.bf16.msra.mxu0 %v479
    %503 = vmatprep.subr.bf16.mxu0 0
    %504 = vmatpush1.bf16.msra.mxu0 %v480
    %505 = vmatprep.subr.bf16.mxu0 0
    %506 = vmatpush1.bf16.msra.mxu0 0
    %507 = vmatprep.subr.bf16.mxu0 0
    %508 = vmatpush1.bf16.msra.mxu0 0
    %509 = vmatprep.subr.bf16.mxu0 0
    %510 = vmatpush1.bf16.msra.mxu0 0
    %511 = vmatprep.subr.bf16.mxu0 0
    %512 = vmatpush1.bf16.msra.mxu0 0
    %513 = vmatprep.subr.bf16.mxu0 0
    %514 = vmatpush1.bf16.msra.mxu0 0
    %515 = vmatprep.subr.bf16.mxu0 0
    %516 = vmatpush1.bf16.msra.mxu0 0
    %517 = vmatprep.subr.bf16.mxu0 0
    %518 = vmatpush1.bf16.msra.mxu0 0
    %519 = vmatprep.subr.bf16.mxu0 0
    %520 = vmatpush1.bf16.msra.mxu0 0
    %521 = vmatprep.mubr.bf16.mxu0 0
    %522 = vmatmul.mubr.bf16.gmra.mrb[0].mxu0 %v417
    %v523 = vpop.f32.mrb[0].mxu0
    %v524 = vadd.f32 %v439, %v523
    %v525 = vpop.f32.mrb[0].mxu0
    %v526 = vpop.f32.mrb[0].mxu0
    %v527 = vpop.f32.mrb[0].mxu0
    %528 = vdwg.mxu0
    %vm529 = vcmask 130048
    %530 = vst.msk [vmem:[#allocation5] sm:$0xff] %vm529, %v524
    // Predicated region
    $region34: #{tpu_custom_call.1} parent=1 // pred_check
      _
    $region35: #{tpu_custom_call.1} parent=1 // pred_check_branch
      %532 = sbr.rel (0) target = $region37
    $region36: #{tpu_custom_call.1} parent=1 // pred_region
      %s534 = ssub.s32 128, 128
      %535 = vsyncadd [#allocation4], %s534
      %s537 = sshll.u32 [#allocation5], 4
      %s538 = int_to_ptr.vmem [resolvable:$true] %s537
      %540 = dma.vmem_to_hbm [thread:$0]  %s538, 128, %s7, [#allocation4]
    $region37: #{tpu_custom_call.1} parent=1 // pred_fallthru
      _
    // Predicated region
    $region38: #{tpu_custom_call.1} parent=1 // pred_check
      _
    $region39: #{tpu_custom_call.1} parent=1 // pred_check_branch
      %542 = sbr.rel (0) target = $region41
    $region40: #{tpu_custom_call.1} parent=1 // pred_region
      %543 = dma.done [#allocation4], 128
    $region41: #{tpu_custom_call.1} parent=1 // pred_fallthru
      _
    %544 = vsyncpa [#allocation3], 1
    %545 = vsyncpa [#allocation4], 1

</llo_original>
